<compile_context>
chip_gen: v7x
topology: tpu7x:2x2x1
jax: 0.10.0
libtpu: 0.0.40
codegen_flags: <defaults>
</compile_context>

<pallas_src>
import jax
import jax.numpy as jnp
from jax.experimental import pallas as pl
from jax.experimental.pallas import tpu as pltpu


def _pow2_kernel(x_ref, o_ref):
    # Pure VPU elementwise square.
    x = x_ref[...]
    o_ref[...] = x * x


_TARGET_BLOCK_BYTES = 2 << 20   # ~2 MiB per block (in + out double-buffered ≈ 8 MiB VMEM)
_SPLIT_MIN_BYTES = 2 << 20      # only force a 2-way (megacore) split above this


def pow2(x: jax.Array) -> jax.Array:
    """Compute x ** 2 elementwise with a Pallas TPU kernel.

    Accepts any shape (e.g. NCHW); returns same shape/dtype.
    """
    orig_shape = x.shape
    orig_dtype = x.dtype
    n = x.size
    if n == 0:
        return x

    # --- pick a wide, lane-aligned 2D view (copy-free reshape when possible) ---
    width = None
    for w in (1024, 512, 256, 128):
        if n % w == 0:
            width = w
            break

    if width is None:
        # Ragged fallback (size not a multiple of 128): run the kernel on the
        # 128-aligned prefix (copy-free view) and square the <=127-element
        # tail directly.  Only this rare path pays the slice/concat copies.
        x_flat = x.reshape(-1)
        split = (n // 128) * 128
        if split == 0:
            return (x * x)  # tiny input: below lane granularity, no kernel work
        head = pow2(x_flat[:split])          # recurses into the aligned path
        tail = x_flat[split:]
        return jnp.concatenate([head, tail * tail]).reshape(orig_shape)

    x2d = x.reshape(-1).reshape(n // width, width)
    rows = x2d.shape[0]

    # --- tile sizing ---
    itemsize = jnp.dtype(orig_dtype).itemsize
    # Sublane alignment for packed dtypes: f32 -> 8, bf16 -> 16, int8/fp8 -> 32.
    sublane = max(8, 32 // max(itemsize, 1))
    total_bytes = rows * width * itemsize

    if rows <= sublane or total_bytes < _SPLIT_MIN_BYTES:
        # Too little work to pay per-grid-step overhead or to feed two
        # TensorCores: single full-extent block (always a legal block shape).
        tile_rows = rows
    else:
        target_rows = max(sublane, _TARGET_BLOCK_BYTES // (width * itemsize))
        target_rows = (target_rows // sublane) * sublane
        tile_rows = min(target_rows, (rows // sublane) * sublane)
        if pl.cdiv(rows, tile_rows) <= 2:
            # Exactly-two, *balanced* blocks so v7x can hand one to each
            # TensorCore (avoids e.g. a 512-row block paired with an 8-row one).
            half = -(-((rows + 1) // 2) // sublane) * sublane
            tile_rows = max(sublane, min(half, rows))

    grid = (pl.cdiv(rows, tile_rows),)

    out2d = pl.pallas_call(
        _pow2_kernel,
        out_shape=jax.ShapeDtypeStruct((rows, width), orig_dtype),
        grid_spec=pltpu.PrefetchScalarGridSpec(
            num_scalar_prefetch=0,
            grid=grid,
            in_specs=[pl.BlockSpec((tile_rows, width), lambda i: (i, 0))],
            out_specs=pl.BlockSpec((tile_rows, width), lambda i: (i, 0)),
        ),
        compiler_params=pltpu.CompilerParams(
            dimension_semantics=("parallel",),
        ),
        cost_estimate=pl.CostEstimate(
            flops=rows * width,
            transcendentals=0,
            bytes_accessed=2 * rows * width * itemsize,
        ),
    )(x2d)

    return out2d.reshape(orig_shape)


if __name__ == "__main__":
    key = jax.random.PRNGKey(0)
    # NCHW input consistent with the module's conventions.
    x = jax.random.normal(key, (2, 4, 16, 16), dtype=jnp.float32)

    y = pow2(x)
    y = jax.block_until_ready(y)

    y_ref = x ** 2
    assert y.shape == x.shape and y.dtype == x.dtype
    assert jnp.allclose(y, y_ref, rtol=1e-6, atol=0.0), "mismatch vs reference"

    print("KERNEL_OK")
</pallas_src>

<mosaic_0001>
module attributes {stable_mosaic.version = 11 : i64} {
  func.func @_pow2_kernel(%arg0: i32, %arg1: memref<2x1024xf32, #tpu.memory_space<vmem>>, %arg2: memref<2x1024xf32, #tpu.memory_space<vmem>>) attributes {dimension_semantics = [#tpu.dimension_semantics<parallel>], iteration_bounds = array<i64: 1>, scalar_prefetch = 0 : i64, scratch_operands = 0 : i64, tpu.core_type = #tpu.core_type<tc>, window_params = [{transform_indices = @transform_0, window_bounds = array<i64: 2, 1024>}, {transform_indices = @transform_1, window_bounds = array<i64: 2, 1024>}]} {
    %c0 = arith.constant 0 : index
    %c0_0 = arith.constant 0 : index
    %0 = vector.load %arg1[%c0, %c0_0] : memref<2x1024xf32, #tpu.memory_space<vmem>>, vector<2x1024xf32>
    %1 = arith.mulf %0, %0 : vector<2x1024xf32>
    %c0_1 = arith.constant 0 : index
    %c0_2 = arith.constant 0 : index
    %2 = vector.load %arg2[%c0_1, %c0_2] : memref<2x1024xf32, #tpu.memory_space<vmem>>, vector<2x1024xf32>
    tpu.vector_store %arg2[%c0_1, %c0_2], %1 {strides = array<i32>} : memref<2x1024xf32, #tpu.memory_space<vmem>>, vector<2x1024xf32>,
    return
  }
  func.func @transform_0(%arg0: i32) -> (i32, i32) {
    %c0_i32 = arith.constant 0 : i32
    %c0_i32_0 = arith.constant 0 : i32
    return %arg0, %c0_i32 : i32, i32
  }
  func.func @transform_1(%arg0: i32) -> (i32, i32) {
    %c0_i32 = arith.constant 0 : i32
    %c0_i32_0 = arith.constant 0 : i32
    return %arg0, %c0_i32 : i32, i32
  }
}

</mosaic_0001>

<llo_original>
// kernel: tpu_custom_call.1
$region0: #{tpu_custom_call.1}
  #allocation0 [shape = 'u32[]', space=smem, size = 0x4, offset = 0x4, fixed_abs, tag = 'smem constant byte address 0x4 - core index']
  #allocation1 [shape = 'u32[144,128]{1,0:T(1,128)}', space=vmem, size = 0x12000, scoped, tag = 'internal scratch']
  %s0 = inlined_call_operand.hbm [shape: f32[2,1024], index: 0, kind: input, shape index: {}]
  %s1 = inlined_call_operand.hbm [shape: f32[2,1024], index: 1, kind: output, shape index: {}]
  %s2 = sld [smem:[#allocation0]]
  $region18: #{tpu_custom_call.1} parent=0
    _
  %s4 = ssub.s32 1, %s2
  %s5 = scalar_select 0, %s4, %s2
  $region1: #{tpu_custom_call.1} parent=0
    #allocation2 [shape = 'u8[8192]{0}', space=vmem, size = 0x2000, scoped, tag = 'input window, operand 0, single buffered']
    #allocation3 [shape = 's32[1]{0}', space=sflag, size = 0x4, scoped, tag = 'scoped memory for tpu_custom_call.1']
    #allocation4 [shape = 's32[1]{0}', space=sflag, size = 0x4, scoped, tag = 'scoped memory for tpu_custom_call.1']
    #allocation5 [shape = 'u8[8192]{0}', space=vmem, size = 0x2000, scoped, tag = 'output window, operand 0, single buffered']
    %6 = vsyncpa [#allocation3], 0
    %7 = vsyncpa [#allocation4], 0
    // Predicated region
    $region2: #{tpu_custom_call.1} parent=1 // pred_check
      _
    $region3: #{tpu_custom_call.1} parent=1 // pred_check_branch
      %9 = sbr.rel (0) target = $region5
    $region4: #{tpu_custom_call.1} parent=1 // pred_region
      %s11 = ssub.s32 256, 256
      %12 = vsyncadd [#allocation3], %s11
      %s14 = sshll.u32 [#allocation2], 4
      %s15 = int_to_ptr.vmem [resolvable:$true] %s14
      %17 = dma.hbm_to_vmem [thread:$0]  %s0, 256, %s15, [#allocation3]
    $region5: #{tpu_custom_call.1} parent=1 // pred_fallthru
      _
    // Predicated region
    $region6: #{tpu_custom_call.1} parent=1 // pred_check
      _
    $region7: #{tpu_custom_call.1} parent=1 // pred_check_branch
      %19 = sbr.rel (0) target = $region9
    $region8: #{tpu_custom_call.1} parent=1 // pred_region
      %20 = dma.done [#allocation3], 256
    $region9: #{tpu_custom_call.1} parent=1 // pred_fallthru
      _
    %v21 = vld [vmem:[#allocation2] sm:$0xff]
    %v22 = vld [vmem:[#allocation2 + $0x8] sm:$0xff]
    %v23 = vmul.f32 %v21, %v21
    %v24 = vmul.f32 %v22, %v22
    %25 = vst [vmem:[#allocation5] sm:$0xff] %v23
    %26 = vst [vmem:[#allocation5 + $0x8] sm:$0xff] %v24
    // Predicated region
    $region10: #{tpu_custom_call.1} parent=1 // pred_check
      _
    $region11: #{tpu_custom_call.1} parent=1 // pred_check_branch
      %28 = sbr.rel (0) target = $region13
    $region12: #{tpu_custom_call.1} parent=1 // pred_region
      %s30 = ssub.s32 256, 256
      %31 = vsyncadd [#allocation4], %s30
      %s33 = sshll.u32 [#allocation5], 4
      %s34 = int_to_ptr.vmem [resolvable:$true] %s33
      %36 = dma.vmem_to_hbm [thread:$0]  %s34, 256, %s1, [#allocation4]
    $region13: #{tpu_custom_call.1} parent=1 // pred_fallthru
      _
    // Predicated region
    $region14: #{tpu_custom_call.1} parent=1 // pred_check
      _
    $region15: #{tpu_custom_call.1} parent=1 // pred_check_branch
      %38 = sbr.rel (0) target = $region17
    $region16: #{tpu_custom_call.1} parent=1 // pred_region
      %39 = dma.done [#allocation4], 256
    $region17: #{tpu_custom_call.1} parent=1 // pred_fallthru
      _
    %40 = vsyncpa [#allocation3], 1
    %41 = vsyncpa [#allocation4], 1

</llo_original>
